<compile_context>
chip_gen: v7x
topology: tpu7x:2x2x1
jax: 0.10.0
libtpu: 0.0.40
codegen_flags: <defaults>
</compile_context>

<pallas_src>
import jax
import jax.numpy as jnp
from jax import lax
from jax.experimental import pallas as pl
from jax.experimental.pallas import tpu as pltpu


def _round_up(a, b):
    return (a + b - 1) // b * b


def _stats_kernel(x_ref, sum_ref, gram_ref):
    # x_ref: (tile_m, C_in)   sum_ref: (1, C_in) f32   gram_ref: (C_in, C_in) f32
    @pl.when(pl.program_id(0) == 0)
    def _():
        sum_ref[...] = jnp.zeros_like(sum_ref)
        gram_ref[...] = jnp.zeros_like(gram_ref)

    x = x_ref[...]
    sum_ref[...] += jnp.sum(x.astype(jnp.float32), axis=0, keepdims=True)
    # G += x^T x : contract the pixel dim of both operands, f32 accumulation on the MXU.
    gram_ref[...] += lax.dot_general(
        x, x, (((0,), (0,)), ((), ())), preferred_element_type=jnp.float32)


def _deconv_bn_relu_kernel(x_ref, w_ref, scale_ref, shift_ref, o_ref):
    # x_ref: (tile_m, C_in)  w_ref: (C_in, K2C_pad)  scale/shift: (1, K2C_pad)  o_ref: f32
    y = jnp.dot(x_ref[...], w_ref[...], preferred_element_type=jnp.float32)
    o_ref[...] = jnp.maximum(y * scale_ref[...] + shift_ref[...], 0.0)


def _pick_tile_m(M, c_in, k2c_pad, in_bytes, budget_bytes=24 * 1024 * 1024):
    # Double-buffered bf16 input block + double-buffered f32 output block per pixel row;
    # budget leaves headroom under v7x's 64 MiB physical VMEM.
    per_row = 2 * (c_in * in_bytes + k2c_pad * 4)
    t = max(16, min(1024, budget_bytes // max(per_row, 1)))
    t = (t // 16) * 16
    return int(min(t, _round_up(M, 16)))


def deconv2d_forward(x, weight, bias, gamma, beta, *, stride, eps=1e-5,
                     tile_m=None, compute_dtype=jnp.bfloat16):
    """x: (N, C_in, H, W) NCHW.  weight: (C_in, C_out, kH, kW) (PyTorch ConvTranspose2d)."""
    N, C_in, H, W = x.shape
    C_in_w, C_out, kH, kW = weight.shape
    assert C_in == C_in_w
    # TODO(synk): general overlapping-window ConvTranspose2d (stride < kernel_size or
    # padding > 0) is not handled; this config (kernel_size == stride, pad 0) has no overlap.
    assert kH == stride and kW == stride

    # `bias` is intentionally unused: a per-channel constant is exactly cancelled by
    # training-mode BatchNorm (mean subtraction removes it, variance is unchanged).
    del bias

    K2 = kH * kW
    M = N * H * W
    K2C = K2 * C_out
    K2C_pad = _round_up(K2C, 128)            # lane-dense (>=128-wide) output stores
    f32 = jnp.float32
    in_bytes = jnp.dtype(compute_dtype).itemsize

    if tile_m is None:
        tile_m = _pick_tile_m(M, C_in, K2C_pad, in_bytes)
    tile_m = max(16, (int(tile_m) // 16) * 16)
    M_pad = _round_up(M, tile_m)
    num_tiles = M_pad // tile_m

    # ---- glue: repack to the kernel layout (pixels x channels) ----
    x2 = jnp.transpose(x, (0, 2, 3, 1)).reshape(M, C_in).astype(compute_dtype)
    if M_pad != M:
        x2 = jnp.pad(x2, ((0, M_pad - M), (0, 0)))           # zero rows: stats unaffected
    w2 = jnp.transpose(weight, (0, 2, 3, 1)).reshape(C_in, K2C).astype(compute_dtype)
    w2p = jnp.pad(w2, ((0, 0), (0, K2C_pad - K2C)))          # zero cols -> zeros, sliced off

    cparams_seq = pltpu.CompilerParams(
        dimension_semantics=("arbitrary",),                  # grid axis carries accumulators
        vmem_limit_bytes=32 * 1024 * 1024)
    cparams_par = pltpu.CompilerParams(
        dimension_semantics=("parallel",),                   # shard M tiles across TCs (v7x)
        vmem_limit_bytes=32 * 1024 * 1024)

    # ---- pass 1: BN batch statistics, analytically from x (accumulated across M tiles) ----
    sum_x, gram = pl.pallas_call(
        _stats_kernel,
        out_shape=(jax.ShapeDtypeStruct((1, C_in), f32),
                   jax.ShapeDtypeStruct((C_in, C_in), f32)),
        grid=(num_tiles,),
        in_specs=[pl.BlockSpec((tile_m, C_in), lambda i: (i, 0))],
        out_specs=(pl.BlockSpec((1, C_in), lambda i: (0, 0)),
                   pl.BlockSpec((C_in, C_in), lambda i: (0, 0))),
        compiler_params=cparams_seq,
    )(x2)

    # ---- tiny per-channel math (O(C_in * K2 * C_out)); plain JAX glue between the passes ----
    w2f = w2.astype(f32)                                     # same rounded weights as the matmul
    col_sum = sum_x @ w2f                                    # (1, K2C): sum_m y[m, col]
    col_sq = jnp.sum(w2f * (gram @ w2f), axis=0, keepdims=True)  # (1, K2C): sum_m y[m, col]^2
    n_elems = jnp.asarray(M * K2, f32)                       # = N * H_out * W_out per channel
    ch_sum = col_sum.reshape(K2, C_out).sum(axis=0)
    ch_sq = col_sq.reshape(K2, C_out).sum(axis=0)
    mean = ch_sum / n_elems
    var = ch_sq / n_elems - mean * mean                      # biased variance (PyTorch BN fwd)
    inv = lax.rsqrt(var + eps)
    scale = gamma.astype(f32) * inv                          # (C_out,)
    shift = beta.astype(f32) - mean * scale
    scale_row = jnp.pad(jnp.tile(scale, K2), (0, K2C_pad - K2C)).reshape(1, K2C_pad)
    shift_row = jnp.pad(jnp.tile(shift, K2), (0, K2C_pad - K2C)).reshape(1, K2C_pad)

    # ---- pass 2: matmul + fused BN affine + ReLU, tiled & double-buffered over M ----
    y2 = pl.pallas_call(
        _deconv_bn_relu_kernel,
        out_shape=jax.ShapeDtypeStruct((M_pad, K2C_pad), f32),
        grid=(num_tiles,),
        in_specs=[
            pl.BlockSpec((tile_m, C_in), lambda i: (i, 0)),
            pl.BlockSpec((C_in, K2C_pad), lambda i: (0, 0)),   # resident: DMA'd once
            pl.BlockSpec((1, K2C_pad), lambda i: (0, 0)),      # resident
            pl.BlockSpec((1, K2C_pad), lambda i: (0, 0)),      # resident
        ],
        out_specs=pl.BlockSpec((tile_m, K2C_pad), lambda i: (i, 0)),
        compiler_params=cparams_par,
    )(x2, w2p, scale_row, shift_row)

    # ---- glue: unpack to NCHW output (N, C_out, H*kH, W*kW) ----
    y = y2[:M, :K2C].reshape(N, H, W, kH, kW, C_out)
    y = jnp.transpose(y, (0, 5, 1, 3, 2, 4))                 # (N, C_out, H, kH, W, kW)
    return y.reshape(N, C_out, H * kH, W * kW)


def _reference(x, weight, bias, gamma, beta, stride, eps=1e-5):
    """Pure-JAX reference: lax transposed conv (with bias) + training-mode BN + ReLU."""
    C_in, C_out, kH, kW = weight.shape
    rhs = jnp.transpose(jnp.flip(weight, axis=(2, 3)), (1, 0, 2, 3))  # (C_out, C_in, kH, kW)
    y = lax.conv_general_dilated(
        x, rhs,
        window_strides=(1, 1),
        padding=((kH - 1, kH - 1), (kW - 1, kW - 1)),
        lhs_dilation=(stride, stride),
        dimension_numbers=("NCHW", "OIHW", "NCHW"),
    ) + bias[None, :, None, None]
    mean = y.mean(axis=(0, 2, 3), keepdims=True)
    var = ((y - mean) ** 2).mean(axis=(0, 2, 3), keepdims=True)
    yn = (y - mean) * lax.rsqrt(var + eps) * gamma[None, :, None, None] + beta[None, :, None, None]
    return jnp.maximum(yn, 0.0)


if __name__ == "__main__":
    N, C_in, H, W = 2, 4, 16, 16
    C_out, k, stride = 8, 2, 2

    key = jax.random.PRNGKey(0)
    kx, kw, kb = jax.random.split(key, 3)
    x = jax.random.normal(kx, (N, C_in, H, W), dtype=jnp.float32)
    weight = 0.1 * jax.random.normal(kw, (C_in, C_out, k, k), dtype=jnp.float32)
    bias = 0.1 * jax.random.normal(kb, (C_out,), dtype=jnp.float32)
    gamma = jnp.ones((C_out,), dtype=jnp.float32)   # fresh BatchNorm2d init
    beta = jnp.zeros((C_out,), dtype=jnp.float32)

    # tile_m=128 -> 4 M-tiles at this toy size, so the tiled/accumulating path is exercised.
    out = deconv2d_forward(x, weight, bias, gamma, beta, stride=stride, tile_m=128)
    out = jax.block_until_ready(out)
    assert out.shape == (N, C_out, H * stride, W * stride), out.shape

    # Reference uses the same bf16-rounded x/weight the kernel feeds to the MXU, and it KEEPS
    # the conv bias — confirming training-mode BN cancels the bias exactly.
    xr = x.astype(jnp.bfloat16).astype(jnp.float32)
    wr = weight.astype(jnp.bfloat16).astype(jnp.float32)
    ref = _reference(xr, wr, bias, gamma, beta, stride)
    max_err = float(jnp.max(jnp.abs(out - ref)))
    assert jnp.allclose(out, ref, rtol=2e-3, atol=2e-3), max_err

    print("KERNEL_OK")
</pallas_src>

<mosaic_0001>
module attributes {stable_mosaic.version = 11 : i64} {
  func.func @_stats_kernel(%arg0: i32, %arg1: memref<128x4xbf16, #tpu.memory_space<vmem>>, %arg2: memref<1x4xf32, #tpu.memory_space<vmem>>, %arg3: memref<4x4xf32, #tpu.memory_space<vmem>>) attributes {dimension_semantics = [#tpu.dimension_semantics<arbitrary>], iteration_bounds = array<i64: 4>, scalar_prefetch = 0 : i64, scratch_operands = 0 : i64, tpu.core_type = #tpu.core_type<tc>, window_params = [{transform_indices = @transform_0, window_bounds = array<i64: 128, 4>}, {pipeline_mode = #tpu.pipeline_mode<synchronous>, transform_indices = @transform_1, window_bounds = array<i64: 1, 4>}, {pipeline_mode = #tpu.pipeline_mode<synchronous>, transform_indices = @transform_2, window_bounds = array<i64: 4, 4>}]} {
    %c0_i32 = arith.constant 0 : i32
    %0 = arith.cmpi eq, %arg0, %c0_i32 : i32
    %1 = arith.extui %0 : i1 to i32
    %c0_i32_0 = arith.constant 0 : i32
    %2 = arith.cmpi ne, %1, %c0_i32_0 : i32
    scf.if %2 {
      %cst_11 = arith.constant 0.000000e+00 : f32
      %14 = vector.broadcast %cst_11 : f32 to vector<1x4xf32>
      %c0_12 = arith.constant 0 : index
      %c0_13 = arith.constant 0 : index
      %15 = vector.load %arg2[%c0_12, %c0_13] : memref<1x4xf32, #tpu.memory_space<vmem>>, vector<1x4xf32>
      tpu.vector_store %arg2[%c0_12, %c0_13], %14 {strides = array<i32>} : memref<1x4xf32, #tpu.memory_space<vmem>>, vector<1x4xf32>,
      %cst_14 = arith.constant 0.000000e+00 : f32
      %16 = vector.broadcast %cst_14 : f32 to vector<4x4xf32>
      %c0_15 = arith.constant 0 : index
      %c0_16 = arith.constant 0 : index
      %17 = vector.load %arg3[%c0_15, %c0_16] : memref<4x4xf32, #tpu.memory_space<vmem>>, vector<4x4xf32>
      tpu.vector_store %arg3[%c0_15, %c0_16], %16 {strides = array<i32>} : memref<4x4xf32, #tpu.memory_space<vmem>>, vector<4x4xf32>,
    } else {
    }
    %c0 = arith.constant 0 : index
    %c0_1 = arith.constant 0 : index
    %3 = vector.load %arg1[%c0, %c0_1] : memref<128x4xbf16, #tpu.memory_space<vmem>>, vector<128x4xbf16>
    %c0_2 = arith.constant 0 : index
    %c0_3 = arith.constant 0 : index
    %4 = vector.load %arg2[%c0_2, %c0_3] : memref<1x4xf32, #tpu.memory_space<vmem>>, vector<1x4xf32>
    %5 = arith.extf %3 : vector<128x4xbf16> to vector<128x4xf32>
    %cst = arith.constant dense<0.000000e+00> : vector<4xf32>
    %6 = vector.multi_reduction <add>, %5, %cst [0] : vector<128x4xf32> to vector<4xf32>
    %7 = vector.shape_cast %6 : vector<4xf32> to vector<1x4xf32>
    %8 = arith.addf %4, %7 : vector<1x4xf32>
    %c0_4 = arith.constant 0 : index
    %c0_5 = arith.constant 0 : index
    %9 = vector.load %arg2[%c0_4, %c0_5] : memref<1x4xf32, #tpu.memory_space<vmem>>, vector<1x4xf32>
    tpu.vector_store %arg2[%c0_4, %c0_5], %8 {strides = array<i32>} : memref<1x4xf32, #tpu.memory_space<vmem>>, vector<1x4xf32>,
    %c0_6 = arith.constant 0 : index
    %c0_7 = arith.constant 0 : index
    %10 = vector.load %arg3[%c0_6, %c0_7] : memref<4x4xf32, #tpu.memory_space<vmem>>, vector<4x4xf32>
    %cst_8 = arith.constant dense<0.000000e+00> : vector<4x4xf32>
    %11 = tpu.matmul %3, %3, %cst_8 {dimension_numbers = #tpu.dot_dimension_numbers<[0], [0], [1], [1], [0, 1, 1, 1], [], []>} : vector<128x4xbf16>, vector<128x4xbf16>, vector<4x4xf32> -> vector<4x4xf32>
    %12 = arith.addf %10, %11 : vector<4x4xf32>
    %c0_9 = arith.constant 0 : index
    %c0_10 = arith.constant 0 : index
    %13 = vector.load %arg3[%c0_9, %c0_10] : memref<4x4xf32, #tpu.memory_space<vmem>>, vector<4x4xf32>
    tpu.vector_store %arg3[%c0_9, %c0_10], %12 {strides = array<i32>} : memref<4x4xf32, #tpu.memory_space<vmem>>, vector<4x4xf32>,
    return
  }
  func.func @transform_0(%arg0: i32) -> (i32, i32) {
    %c0_i32 = arith.constant 0 : i32
    %c0_i32_0 = arith.constant 0 : i32
    return %arg0, %c0_i32 : i32, i32
  }
  func.func @transform_1(%arg0: i32) -> (i32, i32) {
    %c0_i32 = arith.constant 0 : i32
    %c0_i32_0 = arith.constant 0 : i32
    %c0_i32_1 = arith.constant 0 : i32
    return %c0_i32, %c0_i32_0 : i32, i32
  }
  func.func @transform_2(%arg0: i32) -> (i32, i32) {
    %c0_i32 = arith.constant 0 : i32
    %c0_i32_0 = arith.constant 0 : i32
    %c0_i32_1 = arith.constant 0 : i32
    return %c0_i32, %c0_i32_0 : i32, i32
  }
}

</mosaic_0001>

<llo_original>
// kernel: tpu_custom_call.1
$region0: #{tpu_custom_call.1}
  #allocation0 [shape = 'u32[]', space=smem, size = 0x4, offset = 0x4, fixed_abs, tag = 'smem constant byte address 0x4 - core index']
  #allocation1 [shape = 'u32[144,128]{1,0:T(1,128)}', space=vmem, size = 0x12000, scoped, tag = 'internal scratch']
  %s0 = inlined_call_operand.vmem [shape: bf16[512,4], index: 0, kind: input, shape index: {}]
  %s1 = inlined_call_operand.hbm [shape: f32[1,4], index: 1, kind: output, shape index: {0}]
  %s2 = inlined_call_operand.hbm [shape: f32[4,4], index: 2, kind: output, shape index: {1}]
  %3 = xla_tuple %s1, %s2
  %s4 = sld [smem:[#allocation0]]
  $region49: #{tpu_custom_call.1} parent=0
    _
  %s6 = ssub.s32 1, %s4
  %s7 = scalar_select 0, %s6, %s4
  $region1: #{tpu_custom_call.1} parent=0
    #allocation2 [shape = 'u8[512]{0}', space=vmem, size = 0x400, scoped, tag = 'output window, operand 0, single buffered']
    #allocation3 [shape = 's32[2]{0}', space=sflag, size = 0x8, scoped, tag = 'scoped memory for tpu_custom_call.1']
    #allocation4 [shape = 'u8[2048]{0}', space=vmem, size = 0x800, scoped, tag = 'output window, operand 1, single buffered']
    #allocation5 [shape = 's32[1]{0}', space=sflag, size = 0x4, scoped, tag = 'scoped memory for tpu_custom_call.1']
    %8 = vsyncpa [#allocation3], 0
    %9 = vsyncpa [#allocation5], 0
    loop: start=0, step=1, limit=6
    $region2: #{tpu_custom_call.1} parent=1 // loop_pre_header
      _
    $region3: #{tpu_custom_call.1} parent=1 // loop_header
      %s11 = sphi 0, %s15
      %p12 = scmp.ge.s32.totalorder %s11, 6
      %s21 = sphi 0, %s23
      %s24 = sphi 0, %s21
      %s25 = sphi 0, %s24
      %s41 = sphi 0, %s25
      %s45 = sphi 0, %s45
      %s47 = sphi 0, %s45
      %s48 = sphi 0, %s47
      %s62 = sphi 0, %s48
      %s66 = sphi 0, %s66
      %s68 = sphi 0, %s66
      %s69 = sphi 0, %s68
      %s83 = sphi 0, %s69
    $region4: #{tpu_custom_call.1} parent=1 // loop_header_branch
      %14 = sbr.rel (%p12) target = $region8
    $region5: #{tpu_custom_call.1} parent=1 // loop_body
      %s16 = ssub.s32 %s11, 1
      %s17 = ssub.s32 %s11, 2
      %s18 = sadd.s32 %s11, 1
      %s19 = ssub.s32 %s11, %s18
      %p20 = scmp.eq.s32.totalorder %s19, 0
      %s22 = sadd.s32 %s21, 1
      %s23 = scalar_select %p20, %s21, %s22
      %p26 = pneg %p20
      %p27 = scmp.eq.s32.totalorder %s11, 3
      %p28 = por %p26, %p27
      %p29 = scmp.ne.s32.totalorder %s21, %s24
      %p30 = scmp.eq.s32.totalorder %s11, 0
      %p31 = por %p29, %p30
      %p32 = scmp.ne.s32.totalorder %s21, %s24
      %p33 = scmp.eq.s32.totalorder %s16, 3
      %p34 = por %p32, %p33
      %p35 = scmp.ne.s32.totalorder %s24, %s25
      %p36 = scmp.eq.s32.totalorder %s16, 0
      %p37 = por %p35, %p36
      %p38 = scmp.ne.s32.totalorder %s24, %s25
      %p39 = scmp.eq.s32.totalorder %s17, 3
      %p40 = por %p38, %p39
      %p42 = scmp.ne.s32.totalorder %s25, %s41
      %p43 = scmp.eq.s32.totalorder %s17, 0
      %p44 = por %p42, %p43
      %s46 = sadd.s32 %s45, 1
      %p49 = scmp.eq.s32.totalorder %s11, 3
      %p50 = scmp.ne.s32.totalorder %s45, %s47
      %p51 = scmp.eq.s32.totalorder %s11, 0
      %p52 = por %p50, %p51
      %p53 = scmp.ne.s32.totalorder %s45, %s47
      %p54 = scmp.eq.s32.totalorder %s16, 3
      %p55 = por %p53, %p54
      %p56 = scmp.ne.s32.totalorder %s47, %s48
      %p57 = scmp.eq.s32.totalorder %s16, 0
      %p58 = por %p56, %p57
      %p59 = scmp.ne.s32.totalorder %s47, %s48
      %p60 = scmp.eq.s32.totalorder %s17, 3
      %p61 = por %p59, %p60
      %p63 = scmp.ne.s32.totalorder %s48, %s62
      %p64 = scmp.eq.s32.totalorder %s17, 0
      %p65 = por %p63, %p64
      %s67 = sadd.s32 %s66, 1
      %p70 = scmp.eq.s32.totalorder %s11, 3
      %p71 = scmp.ne.s32.totalorder %s66, %s68
      %p72 = scmp.eq.s32.totalorder %s11, 0
      %p73 = por %p71, %p72
      %p74 = scmp.ne.s32.totalorder %s66, %s68
      %p75 = scmp.eq.s32.totalorder %s16, 3
      %p76 = por %p74, %p75
      %p77 = scmp.ne.s32.totalorder %s68, %s69
      %p78 = scmp.eq.s32.totalorder %s16, 0
      %p79 = por %p77, %p78
      %p80 = scmp.ne.s32.totalorder %s68, %s69
      %p81 = scmp.eq.s32.totalorder %s17, 3
      %p82 = por %p80, %p81
      %p84 = scmp.ne.s32.totalorder %s69, %s83
      %p85 = scmp.eq.s32.totalorder %s17, 0
      %p86 = por %p84, %p85
      %p87 = scmp.le.s32.totalorder 1, %s11
      %p88 = scmp.lt.s32.totalorder %s11, 5
      %p89 = pnand %p87, %p88
      %p90 = pneg %p89
      // Predicated region
      $region9: #{tpu_custom_call.1} parent=5 // pred_check
        _
      $region10: #{tpu_custom_call.1} parent=5 // pred_check_branch
        %92 = sbr.rel (%p89) target = $region12
      $region11: #{tpu_custom_call.1} parent=5 // pred_region
        %s93 = ssub.s32 %s11, 1
      $region12: #{tpu_custom_call.1} parent=5 // pred_fallthru
        _
      %p94 = scmp.lt.s32.totalorder %s11, 4
      // Predicated region
      $region13: #{tpu_custom_call.1} parent=5 // pred_check
        %p95 = pneg %p94
      $region14: #{tpu_custom_call.1} parent=5 // pred_check_branch
        %97 = sbr.rel (%p95) target = $region16
      $region15: #{tpu_custom_call.1} parent=5 // pred_region
        // Predicated region
        $region17: #{tpu_custom_call.1} parent=15 // pred_check
          %p98 = pneg %p31
        $region18: #{tpu_custom_call.1} parent=15 // pred_check_branch
          %100 = sbr.rel (%p98) target = $region20
        $region19: #{tpu_custom_call.1} parent=15 // pred_region
          %s101 = smul.u32 16, %s11
          %p102 = scmp.lt.s32.totalorder %s101, 63
          %s103 = scalar_select %p102, %s101, 63
          %s104 = smul.addr %s103, 4
          %s105 = scalar_lea.vmem %s0, %s104
          %s106 = smul.u32 16, %s11
        $region20: #{tpu_custom_call.1} parent=15 // pred_fallthru
          _
      $region16: #{tpu_custom_call.1} parent=5 // pred_fallthru
        _
      %p107 = scmp.le.s32.totalorder 1, %s11
      %p108 = scmp.lt.s32.totalorder %s11, 5
      %p109 = pnand %p107, %p108
      %p110 = pneg %p109
      // Predicated region
      $region21: #{tpu_custom_call.1} parent=5 // pred_check
        _
      $region22: #{tpu_custom_call.1} parent=5 // pred_check_branch
        %112 = sbr.rel (%p109) target = $region24
      $region23: #{tpu_custom_call.1} parent=5 // pred_region
        %s113 = ssub.s32 %s11, 1
        %s114 = smul.u32 16, %s16
        %p115 = scmp.lt.s32.totalorder %s114, 63
        %s116 = scalar_select %p115, %s114, 63
        %s117 = smul.addr %s116, 4
        %s118 = scalar_lea.vmem %s0, %s117
        %p119 = pneg %p37
        %p120 = pneg %p34
        %p121 = pneg %p58
        %p122 = pneg %p55
        %p123 = pneg %p79
        %p124 = pneg %p76
        %s125 = smul.u32 16, %s16
        %p126 = scmp.lt.s32.totalorder %s125, 63
        %s127 = scalar_select %p126, %s125, 63
        %s128 = smul.addr %s127, 4
        %s129 = scalar_lea.vmem %s0, %s128
        %s130 = smul.u32 16, %s16
        %p132 = scmp.eq.s32.totalorder %s16, 0
        // Predicated region
        $region25: #{tpu_custom_call.1} parent=23 // pred_check
          %p133 = pneg %p132
        $region26: #{tpu_custom_call.1} parent=23 // pred_check_branch
          %135 = sbr.rel (%p133) target = $region28
        $region27: #{tpu_custom_call.1} parent=23 // pred_region
          %vm136 = vcmask 24576
          %137 = vst.msk [vmem:[#allocation2] sm:$0x1] %vm136, 0.0
          %vm138 = vcmask 27648
          %139 = vst.msk [vmem:[#allocation4] sm:$0xf] %vm138, 0.0
        $region28: #{tpu_custom_call.1} parent=23 // pred_fallthru
          _
        %v140 = vld [vmem:[%s129] sm:$0xf]
        %v141 = vld [vmem:[%s129 + $0x4] sm:$0xf]
        %v142 = vld [vmem:[%s129 + $0x8] sm:$0xf]
        %v143 = vld [vmem:[%s129 + $0xc] sm:$0xf]
        %v144 = vld [vmem:[%s129 + $0x10] sm:$0xf]
        %v145 = vld [vmem:[%s129 + $0x14] sm:$0xf]
        %v146 = vld [vmem:[%s129 + $0x18] sm:$0xf]
        %v147 = vld [vmem:[%s129 + $0x1c] sm:$0xf]
        %v148 = vld [vmem:[%s129 + $0x20] sm:$0xf]
        %v149 = vld [vmem:[%s129 + $0x24] sm:$0xf]
        %v150 = vld [vmem:[%s129 + $0x28] sm:$0xf]
        %v151 = vld [vmem:[%s129 + $0x2c] sm:$0xf]
        %v152 = vld [vmem:[%s129 + $0x30] sm:$0xf]
        %v153 = vld [vmem:[%s129 + $0x34] sm:$0xf]
        %v154 = vld [vmem:[%s129 + $0x38] sm:$0xf]
        %v155 = vld [vmem:[%s129 + $0x3c] sm:$0xf]
        %v156 = vld [vmem:[#allocation2] sm:$0x1]
        %v157 = vunpack.c.l.bf16 %v140
        %v158 = vunpack.c.l.bf16 %v141
        %v159 = vunpack.c.l.bf16 %v142
        %v160 = vunpack.c.l.bf16 %v143
        %v161 = vunpack.c.l.bf16 %v144
        %v162 = vunpack.c.l.bf16 %v145
        %v163 = vunpack.c.l.bf16 %v146
        %v164 = vunpack.c.l.bf16 %v147
        %v165 = vunpack.c.l.bf16 %v148
        %v166 = vunpack.c.l.bf16 %v149
        %v167 = vunpack.c.l.bf16 %v150
        %v168 = vunpack.c.l.bf16 %v151
        %v169 = vunpack.c.l.bf16 %v152
        %v170 = vunpack.c.l.bf16 %v153
        %v171 = vunpack.c.l.bf16 %v154
        %v172 = vunpack.c.l.bf16 %v155
        %vm173 = vcmask 31744
        %v174 = vsel %vm173, %v157, 0.0
        %v175 = vsel %vm173, %v158, 0.0
        %v176 = vadd.f32 %v174, %v175
        %v177 = vsel %vm173, %v159, 0.0
        %v178 = vadd.f32 %v176, %v177
        %v179 = vsel %vm173, %v160, 0.0
        %v180 = vadd.f32 %v178, %v179
        %v181 = vsel %vm173, %v161, 0.0
        %v182 = vadd.f32 %v180, %v181
        %v183 = vsel %vm173, %v162, 0.0
        %v184 = vadd.f32 %v182, %v183
        %v185 = vsel %vm173, %v163, 0.0
        %v186 = vadd.f32 %v184, %v185
        %v187 = vsel %vm173, %v164, 0.0
        %v188 = vadd.f32 %v186, %v187
        %v189 = vsel %vm173, %v165, 0.0
        %v190 = vadd.f32 %v188, %v189
        %v191 = vsel %vm173, %v166, 0.0
        %v192 = vadd.f32 %v190, %v191
        %v193 = vsel %vm173, %v167, 0.0
        %v194 = vadd.f32 %v192, %v193
        %v195 = vsel %vm173, %v168, 0.0
        %v196 = vadd.f32 %v194, %v195
        %v197 = vsel %vm173, %v169, 0.0
        %v198 = vadd.f32 %v196, %v197
        %v199 = vsel %vm173, %v170, 0.0
        %v200 = vadd.f32 %v198, %v199
        %v201 = vsel %vm173, %v171, 0.0
        %v202 = vadd.f32 %v200, %v201
        %v203 = vsel %vm173, %v172, 0.0
        %v204 = vadd.f32 %v202, %v203
        %v205 = vrot.slane %v204, 4
        %v206 = vadd.f32 %v204, %v205
        %v207 = vrot.slane %v206, 2
        %v208 = vadd.f32 %v206, %v207
        %v209 = vrot.slane %v208, 1
        %v210 = vadd.f32 %v208, %v209
        %v211 = vadd.f32 %v156, %v210
        %vm212 = vcmask 24576
        %213 = vst.msk [vmem:[#allocation2] sm:$0x1] %vm212, %v211
        %v214 = vld [vmem:[#allocation4] sm:$0xf]
        %v231 = vunpack.c.l.b16 %v140
        %v232 = vunpack.c.l.b16 %v141
        %v233 = vunpack.c.l.b16 %v142
        %v234 = vunpack.c.l.b16 %v143
        %v235 = vunpack.c.l.b16 %v144
        %v236 = vunpack.c.l.b16 %v145
        %v237 = vunpack.c.l.b16 %v146
        %v238 = vunpack.c.l.b16 %v147
        %v239 = vunpack.c.l.b16 %v148
        %v240 = vunpack.c.l.b16 %v149
        %v241 = vunpack.c.l.b16 %v150
        %v242 = vunpack.c.l.b16 %v151
        %v243 = vunpack.c.l.b16 %v152
        %v244 = vunpack.c.l.b16 %v153
        %v245 = vunpack.c.l.b16 %v154
        %v246 = vunpack.c.l.b16 %v155
        %v247 = vpack.c.b16 %v232, %v231
        %v248 = vpack.c.b16 %v234, %v233
        %v249 = vpack.c.b16 %v236, %v235
        %v250 = vpack.c.b16 %v238, %v237
        %v251 = vpack.c.b16 %v240, %v239
        %v252 = vpack.c.b16 %v242, %v241
        %v253 = vpack.c.b16 %v244, %v243
        %v254 = vpack.c.b16 %v246, %v245
        %263 = vxpose.xlu0.c.b16.start [1/8] %v247, 128
        %264 = vxpose.xlu0.c.b16.cont [2/8] %v248, 128
        %265 = vxpose.xlu0.c.b16.cont [3/8] %v249, 128
        %266 = vxpose.xlu0.c.b16.cont [4/8] %v250, 128
        %267 = vxpose.xlu0.c.b16.cont [5/8] %v251, 128
        %268 = vxpose.xlu0.c.b16.cont [6/8] %v252, 128
        %269 = vxpose.xlu0.c.b16.cont [7/8] %v253, 128
        %270 = vxpose.xlu0.c.b16.end [8/8] %v254, 128
        %v271 = vpop.trf.xlu0
        %v272 = vpop.trf.xlu0
        %v273 = vpop.trf.xlu0
        %v274 = vpop.trf.xlu0
        %v275 = vpop.trf.xlu0
        %v276 = vpop.trf.xlu0
        %v277 = vpop.trf.xlu0
        %v278 = vpop.trf.xlu0
        %279 = vmatprep.subr.bf16.mxu0 0
        %280 = vmatpush1.bf16.msra.mxu0 %v247
        %281 = vmatprep.subr.bf16.mxu0 0
        %282 = vmatpush1.bf16.msra.mxu0 %v248
        %283 = vmatprep.subr.bf16.mxu0 0
        %284 = vmatpush1.bf16.msra.mxu0 %v249
        %285 = vmatprep.subr.bf16.mxu0 0
        %286 = vmatpush1.bf16.msra.mxu0 %v250
        %287 = vmatprep.subr.bf16.mxu0 0
        %288 = vmatpush1.bf16.msra.mxu0 %v251
        %289 = vmatprep.subr.bf16.mxu0 0
        %290 = vmatpush1.bf16.msra.mxu0 %v252
        %291 = vmatprep.subr.bf16.mxu0 0
        %292 = vmatpush1.bf16.msra.mxu0 %v253
        %293 = vmatprep.subr.bf16.mxu0 0
        %294 = vmatpush1.bf16.msra.mxu0 %v254
        %295 = vmatprep.subr.bf16.mxu0 0
        %296 = vmatpush1.bf16.msra.mxu0 0
        %297 = vmatprep.subr.bf16.mxu0 0
        %298 = vmatpush1.bf16.msra.mxu0 0
        %299 = vmatprep.subr.bf16.mxu0 0
        %300 = vmatpush1.bf16.msra.mxu0 0
        %301 = vmatprep.subr.bf16.mxu0 0
        %302 = vmatpush1.bf16.msra.mxu0 0
        %303 = vmatprep.subr.bf16.mxu0 0
        %304 = vmatpush1.bf16.msra.mxu0 0
        %305 = vmatprep.subr.bf16.mxu0 0
        %306 = vmatpush1.bf16.msra.mxu0 0
        %307 = vmatprep.subr.bf16.mxu0 0
        %308 = vmatpush1.bf16.msra.mxu0 0
        %309 = vmatprep.subr.bf16.mxu0 0
        %310 = vmatpush1.bf16.msra.mxu0 0
        %311 = vmatprep.mubr.bf16.mxu0 0
        %312 = vmatmul.mubr.bf16.gmra.mrb[0].mxu0 %v271
        %v313 = vpop.f32.mrb[0].mxu0
        %v314 = vadd.f32 0.0, %v313
        %v315 = vpop.f32.mrb[0].mxu0
        %v316 = vpop.f32.mrb[0].mxu0
        %v317 = vpop.f32.mrb[0].mxu0
        %318 = vdwg.mxu0
        %v319 = vadd.f32 %v214, %v314
        %vm320 = vcmask 27648
        %321 = vst.msk [vmem:[#allocation4] sm:$0xf] %vm320, %v319
        // Predicated region
        $region29: #{tpu_custom_call.1} parent=23 // pred_check
          %p322 = pneg %p55
        $region30: #{tpu_custom_call.1} parent=23 // pred_check_branch
          %324 = sbr.rel (%p322) target = $region32
        $region31: #{tpu_custom_call.1} parent=23 // pred_region
          %s326 = ssub.s32 16, 16
          %327 = vsyncadd [#allocation3], %s326
          %s329 = sshll.u32 [#allocation2], 4
          %s330 = int_to_ptr.vmem [resolvable:$true] %s329
          %332 = dma.vmem_to_hbm [thread:$0]  %s330, 16, %s1, [#allocation3]
        $region32: #{tpu_custom_call.1} parent=23 // pred_fallthru
          _
        // Predicated region
        $region33: #{tpu_custom_call.1} parent=23 // pred_check
          %p333 = pneg %p76
        $region34: #{tpu_custom_call.1} parent=23 // pred_check_branch
          %335 = sbr.rel (%p333) target = $region36
        $region35: #{tpu_custom_call.1} parent=23 // pred_region
          %s337 = ssub.s32 64, 64
          %338 = vsyncadd [#allocation5], %s337
          %s340 = sshll.u32 [#allocation4], 4
          %s341 = int_to_ptr.vmem [resolvable:$true] %s340
          %343 = dma.vmem_to_hbm [thread:$0]  %s341, 64, %s2, [#allocation5]
        $region36: #{tpu_custom_call.1} parent=23 // pred_fallthru
          _
        // Predicated region
        $region37: #{tpu_custom_call.1} parent=23 // pred_check
          %p344 = pneg %p55
        $region38: #{tpu_custom_call.1} parent=23 // pred_check_branch
          %346 = sbr.rel (%p344) target = $region40
        $region39: #{tpu_custom_call.1} parent=23 // pred_region
          %347 = dma.done [#allocation3], 16
        $region40: #{tpu_custom_call.1} parent=23 // pred_fallthru
          _
        // Predicated region
        $region41: #{tpu_custom_call.1} parent=23 // pred_check
          %p348 = pneg %p76
        $region42: #{tpu_custom_call.1} parent=23 // pred_check_branch
          %350 = sbr.rel (%p348) target = $region44
        $region43: #{tpu_custom_call.1} parent=23 // pred_region
          %351 = dma.done [#allocation5], 64
        $region44: #{tpu_custom_call.1} parent=23 // pred_fallthru
          _
      $region24: #{tpu_custom_call.1} parent=5 // pred_fallthru
        _
      %p352 = scmp.le.s32.totalorder 2, %s11
      // Predicated region
      $region45: #{tpu_custom_call.1} parent=5 // pred_check
        %p353 = pneg %p352
      $region46: #{tpu_custom_call.1} parent=5 // pred_check_branch
        %355 = sbr.rel (%p353) target = $region48
      $region47: #{tpu_custom_call.1} parent=5 // pred_region
        %s356 = ssub.s32 %s11, 2
      $region48: #{tpu_custom_call.1} parent=5 // pred_fallthru
        _
    $region6: #{tpu_custom_call.1} parent=1 // loop_footer
      %s15 = sadd.s32 1, %s11
    $region7: #{tpu_custom_call.1} parent=1 // loop_footer_branch
      %10 = sbr.rel target = $region3
    $region8: #{tpu_custom_call.1} parent=1 // loop_exit
      _
    %357 = vsyncpa [#allocation3], 1
    %s358 = scalar_lea.sflag [#allocation3], 1
    %359 = vsyncpa %s358, 1
    %360 = vsyncpa [#allocation5], 1

</llo_original>
